<compile_context>
chip_gen: v7x
topology: tpu7x:2x2x1
jax: 0.10.0
libtpu: 0.0.40
codegen_flags: <defaults>
</compile_context>

<pallas_src>
import jax
import jax.numpy as jnp
from jax.experimental import pallas as pl
from jax.experimental.pallas import tpu as pltpu

_N_CORES = 2           # leading "parallel" grid axis (megacore on v7x)
_LANE = 128
_SUBLANE = 8
_VMEM_BUDGET = 16 * 1024 * 1024   # budget for the streamed reward tiles


def _round_up(x, m):
    return ((x + m - 1) // m) * m


def _log_sigmoid(x):
    # log(sigmoid(x)) = min(x, 0) - log(1 + exp(-|x|))  (stable; exp/log -> EUP).
    return jnp.minimum(x, 0.0) - jnp.log(1.0 + jnp.exp(-jnp.abs(x)))


def _bt_loss_kernel(r0_ref, r1_ref, mu_ref, mask_ref, out_ref, d_acc, loss_acc):
    # r0_ref, r1_ref: (t_tile, b_tile) native dtype
    # mu_ref, mask_ref: (1, b_tile) f32
    # out_ref: (8, 128) f32 partial-sum block (one per parallel slice)
    # d_acc:   (1, b_tile) f32 running per-example reward-diff sum
    # loss_acc:(1, b_tile) f32 running per-example loss
    i = pl.program_id(1)          # batch block within this core's slice
    k = pl.program_id(2)          # segment block
    last_i = pl.num_programs(1) - 1
    last_k = pl.num_programs(2) - 1

    @pl.when(jnp.logical_and(i == 0, k == 0))
    def _init_loss():
        loss_acc[...] = jnp.zeros_like(loss_acc)

    @pl.when(k == 0)
    def _init_d():
        d_acc[...] = jnp.zeros_like(d_acc)

    # Single segment reduce on the difference (one XLU pass instead of two).
    diff = r1_ref[...].astype(jnp.float32) - r0_ref[...].astype(jnp.float32)
    d_acc[...] += jnp.sum(diff, axis=0, keepdims=True)            # (1, b_tile)

    @pl.when(k == last_k)
    def _bce():
        d = d_acc[...]
        mu = mu_ref[...]
        mask = mask_ref[...]
        # BCE(sigmoid(d), mu) with torch's -100 log clamp (log-sigmoid form).
        log_p = jnp.maximum(_log_sigmoid(d), -100.0)
        log_1mp = jnp.maximum(_log_sigmoid(-d), -100.0)
        loss_acc[...] += -(mu * log_p + (1.0 - mu) * log_1mp) * mask

    @pl.when(jnp.logical_and(i == last_i, k == last_k))
    def _finalize():
        total = jnp.sum(loss_acc[...], axis=1, keepdims=True)     # (1, 1)
        out_ref[...] = jnp.broadcast_to(total, out_ref.shape)     # lane-dense store


def bradley_terry_loss(rewards_s0, rewards_s1, mu, *, b_tile=None, t_tile=None):
    """rewards_s0 / rewards_s1: (B, T, 1) or (B, T) (any float dtype); mu: (B,).

    Returns the scalar BradleyTerryLoss (f32), matching the PyTorch module.
    """
    r0 = jnp.asarray(rewards_s0)
    r1 = jnp.asarray(rewards_s1)
    if r0.ndim == 3:
        r0 = r0.reshape(r0.shape[0], r0.shape[1])
    if r1.ndim == 3:
        r1 = r1.reshape(r1.shape[0], r1.shape[1])
    mu_f = jnp.asarray(mu, jnp.float32).reshape(-1)

    B, T = r0.shape
    itemsize = jnp.dtype(r0.dtype).itemsize

    if b_tile is None:
        # Batch (lane) tile: multiple of 128, no wider than one core's share.
        b_tile = max(_LANE, min(512, _round_up(max(-(-B // _N_CORES), 1), _LANE)))
    if t_tile is None:
        # Segment (sublane) tile: keep 2 inputs x 2 pipeline buffers under budget.
        t_cap = max(_SUBLANE,
                    (_VMEM_BUDGET // (4 * b_tile * itemsize)) // _SUBLANE * _SUBLANE)
        t_tile = min(_round_up(max(T, 1), _SUBLANE), t_cap)

    B_pad = _round_up(max(B, 1), _N_CORES * b_tile)
    T_pad = _round_up(max(T, 1), t_tile)
    nb_half = (B_pad // b_tile) // _N_CORES
    nt = T_pad // t_tile

    # Lane-dense layout: batch on the 128-lane axis; zero-padded (diff of the
    # padded rows is zero, padded lanes are masked out).
    r0_t = jnp.zeros((T_pad, B_pad), r0.dtype).at[:T, :B].set(r0.T)
    r1_t = jnp.zeros((T_pad, B_pad), r1.dtype).at[:T, :B].set(r1.T)
    mu_p = jnp.zeros((1, B_pad), jnp.float32).at[0, :B].set(mu_f)
    mask = jnp.zeros((1, B_pad), jnp.float32).at[0, :B].set(1.0)

    def rew_map(p, i, k):
        return (k, p * nb_half + i)

    def vec_map(p, i, k):
        return (0, p * nb_half + i)

    out = pl.pallas_call(
        _bt_loss_kernel,
        out_shape=jax.ShapeDtypeStruct((_N_CORES * _SUBLANE, _LANE), jnp.float32),
        grid_spec=pltpu.PrefetchScalarGridSpec(
            num_scalar_prefetch=0,
            grid=(_N_CORES, nb_half, nt),
            in_specs=[
                pl.BlockSpec((t_tile, b_tile), rew_map),
                pl.BlockSpec((t_tile, b_tile), rew_map),
                pl.BlockSpec((1, b_tile), vec_map),
                pl.BlockSpec((1, b_tile), vec_map),
            ],
            out_specs=pl.BlockSpec((_SUBLANE, _LANE), lambda p, i, k: (p, 0)),
            scratch_shapes=[pltpu.VMEM((1, b_tile), jnp.float32),   # d_acc
                            pltpu.VMEM((1, b_tile), jnp.float32)],  # loss_acc
        ),
        compiler_params=pltpu.CompilerParams(
            dimension_semantics=("parallel", "arbitrary", "arbitrary"),
            vmem_limit_bytes=32 * 1024 * 1024,
        ),
    )(r0_t, r1_t, mu_p, mask)

    # One (8,128) partial block per parallel slice; combine and take the mean.
    partials = out[::_SUBLANE, 0]                         # (_N_CORES,)
    return jnp.sum(partials) / jnp.float32(B)


def _reference(rewards_s0, rewards_s1, mu):
    r0 = jnp.asarray(rewards_s0, jnp.float32).reshape(rewards_s0.shape[0], -1)
    r1 = jnp.asarray(rewards_s1, jnp.float32).reshape(rewards_s1.shape[0], -1)
    d = jnp.sum(r1, axis=1) - jnp.sum(r0, axis=1)
    log_p = jnp.maximum(jax.nn.log_sigmoid(d), -100.0)
    log_1mp = jnp.maximum(jax.nn.log_sigmoid(-d), -100.0)
    mu = jnp.asarray(mu, jnp.float32)
    return jnp.mean(-(mu * log_p + (1.0 - mu) * log_1mp))


if __name__ == "__main__":
    key = jax.random.PRNGKey(0)
    k0, k1, k2 = jax.random.split(key, 3)

    B, T = 6, 12
    # Rewards from an MLP head with output dim 1 -> (B, T, 1)
    rewards_s0 = jax.random.normal(k0, (B, T, 1), dtype=jnp.float32)
    rewards_s1 = jax.random.normal(k1, (B, T, 1), dtype=jnp.float32)
    mu = jax.random.uniform(k2, (B,), dtype=jnp.float32)   # preference labels in [0, 1]

    loss = bradley_terry_loss(rewards_s0, rewards_s1, mu)
    jax.block_until_ready(loss)

    ref = _reference(rewards_s0, rewards_s1, mu)
    assert jnp.allclose(loss, ref, atol=1e-5, rtol=1e-5), (loss, ref)

    print("KERNEL_OK")
</pallas_src>

<mosaic_0001>
module attributes {stable_mosaic.version = 11 : i64} {
  func.func @_bt_loss_kernel(%arg0: i32, %arg1: i32, %arg2: i32, %arg3: memref<16x128xf32, #tpu.memory_space<vmem>>, %arg4: memref<16x128xf32, #tpu.memory_space<vmem>>, %arg5: memref<1x128xf32, #tpu.memory_space<vmem>>, %arg6: memref<1x128xf32, #tpu.memory_space<vmem>>, %arg7: memref<8x128xf32, #tpu.memory_space<vmem>>, %arg8: memref<1x128xf32, #tpu.memory_space<vmem>>, %arg9: memref<1x128xf32, #tpu.memory_space<vmem>>) attributes {dimension_semantics = [#tpu.dimension_semantics<parallel>, #tpu.dimension_semantics<arbitrary>, #tpu.dimension_semantics<arbitrary>], iteration_bounds = array<i64: 2, 1, 1>, scalar_prefetch = 0 : i64, scratch_operands = 2 : i64, tpu.core_type = #tpu.core_type<tc>, window_params = [{transform_indices = @transform_0, window_bounds = array<i64: 16, 128>}, {transform_indices = @transform_1, window_bounds = array<i64: 16, 128>}, {transform_indices = @transform_2, window_bounds = array<i64: 1, 128>}, {transform_indices = @transform_3, window_bounds = array<i64: 1, 128>}, {transform_indices = @transform_4, window_bounds = array<i64: 8, 128>}]} {
    %c0_i32 = arith.constant 0 : i32
    %0 = arith.cmpi eq, %arg1, %c0_i32 : i32
    %c0_i32_0 = arith.constant 0 : i32
    %1 = arith.cmpi eq, %arg2, %c0_i32_0 : i32
    %2 = arith.andi %0, %1 : i1
    %3 = arith.extui %2 : i1 to i32
    %c0_i32_1 = arith.constant 0 : i32
    %4 = arith.cmpi ne, %3, %c0_i32_1 : i32
    scf.if %4 {
      %cst_16 = arith.constant 0.000000e+00 : f32
      %24 = vector.broadcast %cst_16 : f32 to vector<1x128xf32>
      %c0_17 = arith.constant 0 : index
      %c0_18 = arith.constant 0 : index
      %25 = vector.load %arg9[%c0_17, %c0_18] : memref<1x128xf32, #tpu.memory_space<vmem>>, vector<1x128xf32>
      tpu.vector_store %arg9[%c0_17, %c0_18], %24 {strides = array<i32>} : memref<1x128xf32, #tpu.memory_space<vmem>>, vector<1x128xf32>,
    } else {
    }
    %c0_i32_2 = arith.constant 0 : i32
    %5 = arith.cmpi eq, %arg2, %c0_i32_2 : i32
    %6 = arith.extui %5 : i1 to i32
    %c0_i32_3 = arith.constant 0 : i32
    %7 = arith.cmpi ne, %6, %c0_i32_3 : i32
    scf.if %7 {
      %cst_16 = arith.constant 0.000000e+00 : f32
      %24 = vector.broadcast %cst_16 : f32 to vector<1x128xf32>
      %c0_17 = arith.constant 0 : index
      %c0_18 = arith.constant 0 : index
      %25 = vector.load %arg8[%c0_17, %c0_18] : memref<1x128xf32, #tpu.memory_space<vmem>>, vector<1x128xf32>
      tpu.vector_store %arg8[%c0_17, %c0_18], %24 {strides = array<i32>} : memref<1x128xf32, #tpu.memory_space<vmem>>, vector<1x128xf32>,
    } else {
    }
    %c0 = arith.constant 0 : index
    %c0_4 = arith.constant 0 : index
    %8 = vector.load %arg4[%c0, %c0_4] : memref<16x128xf32, #tpu.memory_space<vmem>>, vector<16x128xf32>
    %c0_5 = arith.constant 0 : index
    %c0_6 = arith.constant 0 : index
    %9 = vector.load %arg3[%c0_5, %c0_6] : memref<16x128xf32, #tpu.memory_space<vmem>>, vector<16x128xf32>
    %10 = arith.subf %8, %9 : vector<16x128xf32>
    %c0_7 = arith.constant 0 : index
    %c0_8 = arith.constant 0 : index
    %11 = vector.load %arg8[%c0_7, %c0_8] : memref<1x128xf32, #tpu.memory_space<vmem>>, vector<1x128xf32>
    %cst = arith.constant dense<0.000000e+00> : vector<128xf32>
    %12 = vector.multi_reduction <add>, %10, %cst [0] : vector<16x128xf32> to vector<128xf32>
    %13 = vector.shape_cast %12 : vector<128xf32> to vector<1x128xf32>
    %14 = arith.addf %11, %13 : vector<1x128xf32>
    %c0_9 = arith.constant 0 : index
    %c0_10 = arith.constant 0 : index
    %15 = vector.load %arg8[%c0_9, %c0_10] : memref<1x128xf32, #tpu.memory_space<vmem>>, vector<1x128xf32>
    tpu.vector_store %arg8[%c0_9, %c0_10], %14 {strides = array<i32>} : memref<1x128xf32, #tpu.memory_space<vmem>>, vector<1x128xf32>,
    %c0_i32_11 = arith.constant 0 : i32
    %16 = arith.cmpi eq, %arg2, %c0_i32_11 : i32
    %17 = arith.extui %16 : i1 to i32
    %c0_i32_12 = arith.constant 0 : i32
    %18 = arith.cmpi ne, %17, %c0_i32_12 : i32
    scf.if %18 {
      %c0_16 = arith.constant 0 : index
      %c0_17 = arith.constant 0 : index
      %24 = vector.load %arg8[%c0_16, %c0_17] : memref<1x128xf32, #tpu.memory_space<vmem>>, vector<1x128xf32>
      %c0_18 = arith.constant 0 : index
      %c0_19 = arith.constant 0 : index
      %25 = vector.load %arg5[%c0_18, %c0_19] : memref<1x128xf32, #tpu.memory_space<vmem>>, vector<1x128xf32>
      %c0_20 = arith.constant 0 : index
      %c0_21 = arith.constant 0 : index
      %26 = vector.load %arg6[%c0_20, %c0_21] : memref<1x128xf32, #tpu.memory_space<vmem>>, vector<1x128xf32>
      %cst_22 = arith.constant 0.000000e+00 : f32
      %27 = vector.broadcast %cst_22 : f32 to vector<1x128xf32>
      %28 = arith.minimumf %24, %27 : vector<1x128xf32>
      %29 = math.absf %24 : vector<1x128xf32>
      %cst_23 = arith.constant 0.000000e+00 : f32
      %30 = vector.broadcast %cst_23 : f32 to vector<1x128xf32>
      %31 = arith.subf %30, %29 : vector<1x128xf32>
      %32 = math.exp %31 : vector<1x128xf32>
      %cst_24 = arith.constant 1.000000e+00 : f32
      %33 = vector.broadcast %cst_24 : f32 to vector<1x128xf32>
      %34 = arith.addf %33, %32 : vector<1x128xf32>
      %35 = math.log %34 : vector<1x128xf32>
      %36 = arith.subf %28, %35 : vector<1x128xf32>
      %cst_25 = arith.constant -1.000000e+02 : f32
      %37 = vector.broadcast %cst_25 : f32 to vector<1x128xf32>
      %38 = arith.maximumf %36, %37 : vector<1x128xf32>
      %cst_26 = arith.constant 0.000000e+00 : f32
      %39 = vector.broadcast %cst_26 : f32 to vector<1x128xf32>
      %40 = arith.subf %39, %24 : vector<1x128xf32>
      %cst_27 = arith.constant 0.000000e+00 : f32
      %41 = vector.broadcast %cst_27 : f32 to vector<1x128xf32>
      %42 = arith.minimumf %40, %41 : vector<1x128xf32>
      %43 = math.absf %40 : vector<1x128xf32>
      %cst_28 = arith.constant 0.000000e+00 : f32
      %44 = vector.broadcast %cst_28 : f32 to vector<1x128xf32>
      %45 = arith.subf %44, %43 : vector<1x128xf32>
      %46 = math.exp %45 : vector<1x128xf32>
      %cst_29 = arith.constant 1.000000e+00 : f32
      %47 = vector.broadcast %cst_29 : f32 to vector<1x128xf32>
      %48 = arith.addf %47, %46 : vector<1x128xf32>
      %49 = math.log %48 : vector<1x128xf32>
      %50 = arith.subf %42, %49 : vector<1x128xf32>
      %cst_30 = arith.constant -1.000000e+02 : f32
      %51 = vector.broadcast %cst_30 : f32 to vector<1x128xf32>
      %52 = arith.maximumf %50, %51 : vector<1x128xf32>
      %c0_31 = arith.constant 0 : index
      %c0_32 = arith.constant 0 : index
      %53 = vector.load %arg9[%c0_31, %c0_32] : memref<1x128xf32, #tpu.memory_space<vmem>>, vector<1x128xf32>
      %54 = arith.mulf %25, %38 : vector<1x128xf32>
      %cst_33 = arith.constant 1.000000e+00 : f32
      %55 = vector.broadcast %cst_33 : f32 to vector<1x128xf32>
      %56 = arith.subf %55, %25 : vector<1x128xf32>
      %57 = arith.mulf %56, %52 : vector<1x128xf32>
      %58 = arith.addf %54, %57 : vector<1x128xf32>
      %cst_34 = arith.constant 0.000000e+00 : f32
      %59 = vector.broadcast %cst_34 : f32 to vector<1x128xf32>
      %60 = arith.subf %59, %58 : vector<1x128xf32>
      %61 = arith.mulf %60, %26 : vector<1x128xf32>
      %62 = arith.addf %53, %61 : vector<1x128xf32>
      %c0_35 = arith.constant 0 : index
      %c0_36 = arith.constant 0 : index
      %63 = vector.load %arg9[%c0_35, %c0_36] : memref<1x128xf32, #tpu.memory_space<vmem>>, vector<1x128xf32>
      tpu.vector_store %arg9[%c0_35, %c0_36], %62 {strides = array<i32>} : memref<1x128xf32, #tpu.memory_space<vmem>>, vector<1x128xf32>,
    } else {
    }
    %c0_i32_13 = arith.constant 0 : i32
    %19 = arith.cmpi eq, %arg1, %c0_i32_13 : i32
    %c0_i32_14 = arith.constant 0 : i32
    %20 = arith.cmpi eq, %arg2, %c0_i32_14 : i32
    %21 = arith.andi %19, %20 : i1
    %22 = arith.extui %21 : i1 to i32
    %c0_i32_15 = arith.constant 0 : i32
    %23 = arith.cmpi ne, %22, %c0_i32_15 : i32
    scf.if %23 {
      %c0_16 = arith.constant 0 : index
      %c0_17 = arith.constant 0 : index
      %24 = vector.load %arg9[%c0_16, %c0_17] : memref<1x128xf32, #tpu.memory_space<vmem>>, vector<1x128xf32>
      %cst_18 = arith.constant dense<0.000000e+00> : vector<1xf32>
      %25 = vector.multi_reduction <add>, %24, %cst_18 [1] : vector<1x128xf32> to vector<1xf32>
      %26 = vector.shape_cast %25 : vector<1xf32> to vector<1x1xf32>
      %27 = vector.shape_cast %26 : vector<1x1xf32> to vector<1x1xf32>
      %28 = vector.broadcast %27 : vector<1x1xf32> to vector<8x128xf32>
      %c0_19 = arith.constant 0 : index
      %c0_20 = arith.constant 0 : index
      %29 = vector.load %arg7[%c0_19, %c0_20] : memref<8x128xf32, #tpu.memory_space<vmem>>, vector<8x128xf32>
      tpu.vector_store %arg7[%c0_19, %c0_20], %28 {strides = array<i32>} : memref<8x128xf32, #tpu.memory_space<vmem>>, vector<8x128xf32>,
    } else {
    }
    return
  }
  func.func @transform_0(%arg0: i32, %arg1: i32, %arg2: i32) -> (i32, i32) {
    %c1_i32 = arith.constant 1 : i32
    %0 = arith.muli %arg0, %c1_i32 : i32
    %1 = arith.addi %0, %arg1 : i32
    %c0_i32 = arith.constant 0 : i32
    return %arg2, %1 : i32, i32
  }
  func.func @transform_1(%arg0: i32, %arg1: i32, %arg2: i32) -> (i32, i32) {
    %c1_i32 = arith.constant 1 : i32
    %0 = arith.muli %arg0, %c1_i32 : i32
    %1 = arith.addi %0, %arg1 : i32
    %c0_i32 = arith.constant 0 : i32
    return %arg2, %1 : i32, i32
  }
  func.func @transform_2(%arg0: i32, %arg1: i32, %arg2: i32) -> (i32, i32) {
    %c1_i32 = arith.constant 1 : i32
    %0 = arith.muli %arg0, %c1_i32 : i32
    %1 = arith.addi %0, %arg1 : i32
    %c0_i32 = arith.constant 0 : i32
    %c0_i32_0 = arith.constant 0 : i32
    return %c0_i32, %1 : i32, i32
  }
  func.func @transform_3(%arg0: i32, %arg1: i32, %arg2: i32) -> (i32, i32) {
    %c1_i32 = arith.constant 1 : i32
    %0 = arith.muli %arg0, %c1_i32 : i32
    %1 = arith.addi %0, %arg1 : i32
    %c0_i32 = arith.constant 0 : i32
    %c0_i32_0 = arith.constant 0 : i32
    return %c0_i32, %1 : i32, i32
  }
  func.func @transform_4(%arg0: i32, %arg1: i32, %arg2: i32) -> (i32, i32) {
    %c0_i32 = arith.constant 0 : i32
    %c0_i32_0 = arith.constant 0 : i32
    return %arg0, %c0_i32 : i32, i32
  }
}

</mosaic_0001>

<llo_original>
// kernel: tpu_custom_call.1
$region0: #{tpu_custom_call.1}
  #allocation0 [shape = 'u32[]', space=smem, size = 0x4, offset = 0x4, fixed_abs, tag = 'smem constant byte address 0x4 - core index']
  #allocation1 [shape = 'u32[144,128]{1,0:T(1,128)}', space=vmem, size = 0x12000, scoped, tag = 'internal scratch']
  #allocation2 [shape = 'f32[1,128]{1,0:T(1,128)}', space=vmem, size = 0x200, scoped, tag = 'scratch operand']
  #allocation3 [shape = 'f32[1,128]{1,0:T(1,128)}', space=vmem, size = 0x200, scoped, tag = 'scratch operand']
  %s0 = inlined_call_operand.hbm [shape: f32[16,256], index: 0, kind: input, shape index: {}]
  %s1 = inlined_call_operand.hbm [shape: f32[16,256], index: 1, kind: input, shape index: {}]
  %s2 = inlined_call_operand.vmem [shape: f32[1,256], index: 2, kind: input, shape index: {}]
  %s3 = inlined_call_operand.vmem [shape: f32[1,256], index: 3, kind: input, shape index: {}]
  %s4 = inlined_call_operand.hbm [shape: f32[16,128], index: 4, kind: output, shape index: {}]
  %s5 = sld [smem:[#allocation0]]
  $region73: #{tpu_custom_call.1} parent=0
    _
  %s7 = ssub.s32 1, %s5
  %s8 = scalar_select 0, %s7, %s5
  $region1: #{tpu_custom_call.1} parent=0
    #allocation4 [shape = 'u8[16384]{0}', space=vmem, size = 0x4000, scoped, tag = 'input window, operand 0']
    #allocation5 [shape = 's32[2]{0}', space=sflag, size = 0x8, scoped, tag = 'scoped memory for tpu_custom_call.1']
    #allocation6 [shape = 's32[2]{0}', space=sflag, size = 0x8, scoped, tag = 'scoped memory for tpu_custom_call.1']
    #allocation7 [shape = 'u8[16384]{0}', space=vmem, size = 0x4000, scoped, tag = 'input window, operand 1']
    #allocation8 [shape = 's32[2]{0}', space=sflag, size = 0x8, scoped, tag = 'scoped memory for tpu_custom_call.1']
    #allocation9 [shape = 'u8[8192]{0}', space=vmem, size = 0x2000, scoped, tag = 'output window, operand 0']
    %9 = vsyncpa [#allocation5], 0
    %s10 = scalar_lea.sflag [#allocation5], 1
    %11 = vsyncpa %s10, 0
    %12 = vsyncpa [#allocation8], 0
    %s13 = scalar_lea.sflag [#allocation8], 1
    %14 = vsyncpa %s13, 0
    %15 = vsyncpa [#allocation6], 0
    %s16 = scalar_lea.sflag [#allocation6], 1
    %17 = vsyncpa %s16, 0
    loop: start=0, step=1, limit=4
    $region2: #{tpu_custom_call.1} parent=1 // loop_pre_header
      _
    $region3: #{tpu_custom_call.1} parent=1 // loop_header
      %s19 = sphi 0, %s23
      %p20 = scmp.ge.s32.totalorder %s19, 4
      %s26 = sphi 0, %s45
      %s27 = sphi 0, %s41
      %s28 = sphi 0, %s37
      %s29 = sphi 0, %s26
      %s30 = sphi 0, %s27
      %s31 = sphi 0, %s28
      %s32 = sphi 0, %s29
      %s33 = sphi 0, %s30
      %s34 = sphi 0, %s31
      %s52 = sphi 0, %s54
      %s55 = sphi 0, %s52
      %s56 = sphi 0, %s55
      %s72 = sphi 0, %s56
      %s82 = sphi 0, %s84
      %s85 = sphi 0, %s82
      %s86 = sphi 0, %s85
      %s102 = sphi 0, %s86
      %s110 = sphi 0, %s112
      %s113 = sphi 0, %s110
      %s114 = sphi 0, %s113
      %s130 = sphi 0, %s114
      %s138 = sphi 0, %s140
      %s141 = sphi 0, %s138
      %s142 = sphi 0, %s141
      %s158 = sphi 0, %s142
      %s164 = sphi 0, %s166
      %s167 = sphi 0, %s164
      %s168 = sphi 0, %s167
      %s184 = sphi 0, %s168
    $region4: #{tpu_custom_call.1} parent=1 // loop_header_branch
      %22 = sbr.rel (%p20) target = $region8
    $region5: #{tpu_custom_call.1} parent=1 // loop_body
      %s24 = ssub.s32 %s19, 1
      %s25 = ssub.s32 %s19, 2
      %s35 = sadd.s32 1, %s28
      %p36 = scmp.ge.s32.totalorder %s35, 1
      %s37 = scalar_select %p36, 0, %s35
      %s38 = sadd.s32 1, %s27
      %s39 = scalar_select %p36, %s38, %s27
      %p40 = scmp.ge.s32.totalorder %s39, 1
      %s41 = scalar_select %p40, 0, %s39
      %s42 = sadd.s32 1, %s26
      %s43 = scalar_select %p40, %s42, %s26
      %p44 = scmp.ge.s32.totalorder %s43, 2
      %s45 = scalar_select %p44, 0, %s43
      %s46 = sadd.s32 %s26, %s27
      %s47 = sadd.s32 %s45, %s41
      %s48 = ssub.s32 %s28, %s37
      %s49 = ssub.s32 %s46, %s47
      %s50 = sor.u32 %s48, %s49
      %p51 = scmp.eq.s32.totalorder %s50, 0
      %s53 = sadd.s32 %s52, 1
      %s54 = scalar_select %p51, %s52, %s53
      %p57 = pneg %p51
      %p58 = scmp.eq.s32.totalorder %s19, 1
      %p59 = por %p57, %p58
      %p60 = scmp.ne.s32.totalorder %s52, %s55
      %p61 = scmp.eq.s32.totalorder %s19, 0
      %p62 = por %p60, %p61
      %p63 = scmp.ne.s32.totalorder %s52, %s55
      %p64 = scmp.eq.s32.totalorder %s24, 1
      %p65 = por %p63, %p64
      %p66 = scmp.ne.s32.totalorder %s55, %s56
      %p67 = scmp.eq.s32.totalorder %s24, 0
      %p68 = por %p66, %p67
      %p69 = scmp.ne.s32.totalorder %s55, %s56
      %p70 = scmp.eq.s32.totalorder %s25, 1
      %p71 = por %p69, %p70
      %p73 = scmp.ne.s32.totalorder %s56, %s72
      %p74 = scmp.eq.s32.totalorder %s25, 0
      %p75 = por %p73, %p74
      %s76 = sadd.s32 %s26, %s27
      %s77 = sadd.s32 %s45, %s41
      %s78 = ssub.s32 %s28, %s37
      %s79 = ssub.s32 %s76, %s77
      %s80 = sor.u32 %s78, %s79
      %p81 = scmp.eq.s32.totalorder %s80, 0
      %s83 = sadd.s32 %s82, 1
      %s84 = scalar_select %p81, %s82, %s83
      %p87 = pneg %p81
      %p88 = scmp.eq.s32.totalorder %s19, 1
      %p89 = por %p87, %p88
      %p90 = scmp.ne.s32.totalorder %s82, %s85
      %p91 = scmp.eq.s32.totalorder %s19, 0
      %p92 = por %p90, %p91
      %p93 = scmp.ne.s32.totalorder %s82, %s85
      %p94 = scmp.eq.s32.totalorder %s24, 1
      %p95 = por %p93, %p94
      %p96 = scmp.ne.s32.totalorder %s85, %s86
      %p97 = scmp.eq.s32.totalorder %s24, 0
      %p98 = por %p96, %p97
      %p99 = scmp.ne.s32.totalorder %s85, %s86
      %p100 = scmp.eq.s32.totalorder %s25, 1
      %p101 = por %p99, %p100
      %p103 = scmp.ne.s32.totalorder %s86, %s102
      %p104 = scmp.eq.s32.totalorder %s25, 0
      %p105 = por %p103, %p104
      %s106 = sadd.s32 %s26, %s27
      %s107 = sadd.s32 %s45, %s41
      %s108 = ssub.s32 %s106, %s107
      %p109 = scmp.eq.s32.totalorder %s108, 0
      %s111 = sadd.s32 %s110, 1
      %s112 = scalar_select %p109, %s110, %s111
      %p115 = pneg %p109
      %p116 = scmp.eq.s32.totalorder %s19, 1
      %p117 = por %p115, %p116
      %p118 = scmp.ne.s32.totalorder %s110, %s113
      %p119 = scmp.eq.s32.totalorder %s19, 0
      %p120 = por %p118, %p119
      %p121 = scmp.ne.s32.totalorder %s110, %s113
      %p122 = scmp.eq.s32.totalorder %s24, 1
      %p123 = por %p121, %p122
      %p124 = scmp.ne.s32.totalorder %s113, %s114
      %p125 = scmp.eq.s32.totalorder %s24, 0
      %p126 = por %p124, %p125
      %p127 = scmp.ne.s32.totalorder %s113, %s114
      %p128 = scmp.eq.s32.totalorder %s25, 1
      %p129 = por %p127, %p128
      %p131 = scmp.ne.s32.totalorder %s114, %s130
      %p132 = scmp.eq.s32.totalorder %s25, 0
      %p133 = por %p131, %p132
      %s134 = sadd.s32 %s26, %s27
      %s135 = sadd.s32 %s45, %s41
      %s136 = ssub.s32 %s134, %s135
      %p137 = scmp.eq.s32.totalorder %s136, 0
      %s139 = sadd.s32 %s138, 1
      %s140 = scalar_select %p137, %s138, %s139
      %p143 = pneg %p137
      %p144 = scmp.eq.s32.totalorder %s19, 1
      %p145 = por %p143, %p144
      %p146 = scmp.ne.s32.totalorder %s138, %s141
      %p147 = scmp.eq.s32.totalorder %s19, 0
      %p148 = por %p146, %p147
      %p149 = scmp.ne.s32.totalorder %s138, %s141
      %p150 = scmp.eq.s32.totalorder %s24, 1
      %p151 = por %p149, %p150
      %p152 = scmp.ne.s32.totalorder %s141, %s142
      %p153 = scmp.eq.s32.totalorder %s24, 0
      %p154 = por %p152, %p153
      %p155 = scmp.ne.s32.totalorder %s141, %s142
      %p156 = scmp.eq.s32.totalorder %s25, 1
      %p157 = por %p155, %p156
      %p159 = scmp.ne.s32.totalorder %s142, %s158
      %p160 = scmp.eq.s32.totalorder %s25, 0
      %p161 = por %p159, %p160
      %s162 = ssub.s32 %s26, %s45
      %p163 = scmp.eq.s32.totalorder %s162, 0
      %s165 = sadd.s32 %s164, 1
      %s166 = scalar_select %p163, %s164, %s165
      %p169 = pneg %p163
      %p170 = scmp.eq.s32.totalorder %s19, 1
      %p171 = por %p169, %p170
      %p172 = scmp.ne.s32.totalorder %s164, %s167
      %p173 = scmp.eq.s32.totalorder %s19, 0
      %p174 = por %p172, %p173
      %p175 = scmp.ne.s32.totalorder %s164, %s167
      %p176 = scmp.eq.s32.totalorder %s24, 1
      %p177 = por %p175, %p176
      %p178 = scmp.ne.s32.totalorder %s167, %s168
      %p179 = scmp.eq.s32.totalorder %s24, 0
      %p180 = por %p178, %p179
      %p181 = scmp.ne.s32.totalorder %s167, %s168
      %p182 = scmp.eq.s32.totalorder %s25, 1
      %p183 = por %p181, %p182
      %p185 = scmp.ne.s32.totalorder %s168, %s184
      %p186 = scmp.eq.s32.totalorder %s25, 0
      %p187 = por %p185, %p186
      %p188 = scmp.le.s32.totalorder 1, %s19
      %p189 = scmp.lt.s32.totalorder %s19, 3
      %p190 = pnand %p188, %p189
      %p191 = pneg %p190
      // Predicated region
      $region9: #{tpu_custom_call.1} parent=5 // pred_check
        _
      $region10: #{tpu_custom_call.1} parent=5 // pred_check_branch
        %193 = sbr.rel (%p190) target = $region12
      $region11: #{tpu_custom_call.1} parent=5 // pred_region
        %s194 = ssub.s32 %s19, 1
      $region12: #{tpu_custom_call.1} parent=5 // pred_fallthru
        _
      %p195 = scmp.lt.s32.totalorder %s19, 2
      // Predicated region
      $region13: #{tpu_custom_call.1} parent=5 // pred_check
        %p196 = pneg %p195
      $region14: #{tpu_custom_call.1} parent=5 // pred_check_branch
        %198 = sbr.rel (%p196) target = $region16
      $region15: #{tpu_custom_call.1} parent=5 // pred_region
        // Predicated region
        $region17: #{tpu_custom_call.1} parent=15 // pred_check
          %p199 = pneg %p62
        $region18: #{tpu_custom_call.1} parent=15 // pred_check_branch
          %201 = sbr.rel (%p199) target = $region20
        $region19: #{tpu_custom_call.1} parent=15 // pred_region
          %s202 = sand.u32 %s52, 1
          %s203 = scalar_lea.sflag [#allocation5], %s202
          %s204 = sand.u32 %s52, 1
          %s205 = smul.addr %s204, 16
          %s206 = scalar_lea.vmem [#allocation4], %s205
          %s207 = sadd.s32 %s26, %s27
          %s208 = smul.u32 2, %s28
          %s210 = ssub.s32 256, 256
          %211 = vsyncadd %s203, %s210
          %s212 = smul.addr %s208, 2
          %s213 = sadd.s32 %s207, %s212
          %s214 = smul.addr %s213, 128
          %s215 = scalar_lea.hbm %s0, %s214
          %s216 = sshll.u32 %s206, 4
          %s217 = int_to_ptr.vmem [resolvable:$true] %s216
          %222 = dma.hbm_to_vmem [thread:$0]  %s215, 256, %s217, %s203, 256, 128, 8
        $region20: #{tpu_custom_call.1} parent=15 // pred_fallthru
          _
        // Predicated region
        $region21: #{tpu_custom_call.1} parent=15 // pred_check
          %p223 = pneg %p92
        $region22: #{tpu_custom_call.1} parent=15 // pred_check_branch
          %225 = sbr.rel (%p223) target = $region24
        $region23: #{tpu_custom_call.1} parent=15 // pred_region
          %s226 = sand.u32 %s82, 1
          %s227 = scalar_lea.sflag [#allocation8], %s226
          %s228 = sand.u32 %s82, 1
          %s229 = smul.addr %s228, 16
          %s230 = scalar_lea.vmem [#allocation7], %s229
          %s231 = sadd.s32 %s26, %s27
          %s232 = smul.u32 2, %s28
          %s234 = ssub.s32 256, 256
          %235 = vsyncadd %s227, %s234
          %s236 = smul.addr %s232, 2
          %s237 = sadd.s32 %s231, %s236
          %s238 = smul.addr %s237, 128
          %s239 = scalar_lea.hbm %s1, %s238
          %s240 = sshll.u32 %s230, 4
          %s241 = int_to_ptr.vmem [resolvable:$true] %s240
          %246 = dma.hbm_to_vmem [thread:$0]  %s239, 256, %s241, %s227, 256, 128, 8
        $region24: #{tpu_custom_call.1} parent=15 // pred_fallthru
          _
        // Predicated region
        $region25: #{tpu_custom_call.1} parent=15 // pred_check
          %p247 = pneg %p120
        $region26: #{tpu_custom_call.1} parent=15 // pred_check_branch
          %249 = sbr.rel (%p247) target = $region28
        $region27: #{tpu_custom_call.1} parent=15 // pred_region
          %s250 = sadd.s32 %s26, %s27
          %p251 = scmp.lt.s32.totalorder %s250, 1
          %s252 = scalar_select %p251, %s250, 1
          %s253 = scalar_lea.vmem %s2, %s252
          %s254 = sadd.s32 %s26, %s27
        $region28: #{tpu_custom_call.1} parent=15 // pred_fallthru
          _
        // Predicated region
        $region29: #{tpu_custom_call.1} parent=15 // pred_check
          %p255 = pneg %p148
        $region30: #{tpu_custom_call.1} parent=15 // pred_check_branch
          %257 = sbr.rel (%p255) target = $region32
        $region31: #{tpu_custom_call.1} parent=15 // pred_region
          %s258 = sadd.s32 %s26, %s27
          %p259 = scmp.lt.s32.totalorder %s258, 1
          %s260 = scalar_select %p259, %s258, 1
          %s261 = scalar_lea.vmem %s3, %s260
          %s262 = sadd.s32 %s26, %s27
        $region32: #{tpu_custom_call.1} parent=15 // pred_fallthru
          _
      $region16: #{tpu_custom_call.1} parent=5 // pred_fallthru
        _
      %p263 = scmp.le.s32.totalorder 1, %s19
      %p264 = scmp.lt.s32.totalorder %s19, 3
      %p265 = pnand %p263, %p264
      %p266 = pneg %p265
      // Predicated region
      $region33: #{tpu_custom_call.1} parent=5 // pred_check
        _
      $region34: #{tpu_custom_call.1} parent=5 // pred_check_branch
        %268 = sbr.rel (%p265) target = $region36
      $region35: #{tpu_custom_call.1} parent=5 // pred_region
        %s269 = ssub.s32 %s19, 1
        %s270 = sand.u32 %s55, 1
        %s271 = scalar_lea.sflag [#allocation5], %s270
        %s272 = sand.u32 %s55, 1
        %s273 = smul.addr %s272, 16
        %s274 = scalar_lea.vmem [#allocation4], %s273
        // Predicated region
        $region37: #{tpu_custom_call.1} parent=35 // pred_check
          %p275 = pneg %p68
        $region38: #{tpu_custom_call.1} parent=35 // pred_check_branch
          %277 = sbr.rel (%p275) target = $region40
        $region39: #{tpu_custom_call.1} parent=35 // pred_region
          %278 = dma.done %s271, 256
        $region40: #{tpu_custom_call.1} parent=35 // pred_fallthru
          _
        %s279 = sand.u32 %s85, 1
        %s280 = scalar_lea.sflag [#allocation8], %s279
        %s281 = sand.u32 %s85, 1
        %s282 = smul.addr %s281, 16
        %s283 = scalar_lea.vmem [#allocation7], %s282
        // Predicated region
        $region41: #{tpu_custom_call.1} parent=35 // pred_check
          %p284 = pneg %p98
        $region42: #{tpu_custom_call.1} parent=35 // pred_check_branch
          %286 = sbr.rel (%p284) target = $region44
        $region43: #{tpu_custom_call.1} parent=35 // pred_region
          %287 = dma.done %s280, 256
        $region44: #{tpu_custom_call.1} parent=35 // pred_fallthru
          _
        %s288 = sand.u32 %s55, 1
        %s289 = scalar_lea.sflag [#allocation5], %s288
        %s290 = sand.u32 %s55, 1
        %s291 = smul.addr %s290, 16
        %s292 = scalar_lea.vmem [#allocation4], %s291
        %p293 = pneg %p68
        %p294 = pneg %p65
        %s295 = sand.u32 %s85, 1
        %s296 = scalar_lea.sflag [#allocation8], %s295
        %s297 = sand.u32 %s85, 1
        %s298 = smul.addr %s297, 16
        %s299 = scalar_lea.vmem [#allocation7], %s298
        %p300 = pneg %p98
        %p301 = pneg %p95
        %s302 = sadd.s32 %s29, %s30
        %p303 = scmp.lt.s32.totalorder %s302, 1
        %s304 = scalar_select %p303, %s302, 1
        %s305 = scalar_lea.vmem %s2, %s304
        %p306 = pneg %p126
        %p307 = pneg %p123
        %s308 = sadd.s32 %s29, %s30
        %p309 = scmp.lt.s32.totalorder %s308, 1
        %s310 = scalar_select %p309, %s308, 1
        %s311 = scalar_lea.vmem %s3, %s310
        %p312 = pneg %p154
        %p313 = pneg %p151
        %p314 = pneg %p180
        %p315 = pneg %p177
        %s316 = sand.u32 %s167, 1
        %s317 = scalar_lea.sflag [#allocation6], %s316
        %s318 = sand.u32 %s167, 1
        %s319 = smul.addr %s318, 8
        %s320 = scalar_lea.vmem [#allocation9], %s319
        %s321 = sadd.s32 %s29, %s30
        %s322 = smul.u32 2, %s31
        %s323 = sadd.s32 %s29, %s30
        %s324 = smul.u32 2, %s31
        %s325 = sadd.s32 %s29, %s30
        %p326 = scmp.lt.s32.totalorder %s325, 1
        %s327 = scalar_select %p326, %s325, 1
        %s328 = scalar_lea.vmem %s2, %s327
        %s329 = sadd.s32 %s29, %s30
        %s330 = sadd.s32 %s29, %s30
        %p331 = scmp.lt.s32.totalorder %s330, 1
        %s332 = scalar_select %p331, %s330, 1
        %s333 = scalar_lea.vmem %s3, %s332
        %s334 = sadd.s32 %s29, %s30
        %p335 = scmp.eq.s32.totalorder %s30, 0
        %p336 = scmp.eq.s32.totalorder %s31, 0
        %p337 = pnand %p335, %p336
        %p338 = pneg %p337
        // Predicated region
        $region45: #{tpu_custom_call.1} parent=35 // pred_check
          _
        $region46: #{tpu_custom_call.1} parent=35 // pred_check_branch
          %340 = sbr.rel (%p337) target = $region48
        $region47: #{tpu_custom_call.1} parent=35 // pred_region
          %341 = vst [vmem:[#allocation3] sm:$0x1] 0.0
        $region48: #{tpu_custom_call.1} parent=35 // pred_fallthru
          _
        // Predicated region
        $region49: #{tpu_custom_call.1} parent=35 // pred_check
          %p342 = pneg %p336
        $region50: #{tpu_custom_call.1} parent=35 // pred_check_branch
          %344 = sbr.rel (%p342) target = $region52
        $region51: #{tpu_custom_call.1} parent=35 // pred_region
          %345 = vst [vmem:[#allocation2] sm:$0x1] 0.0
        $region52: #{tpu_custom_call.1} parent=35 // pred_fallthru
          _
        %v346 = vld [vmem:[%s283] sm:$0xff]
        %v347 = vld [vmem:[%s283 + $0x8] sm:$0xff]
        %v348 = vld [vmem:[%s274] sm:$0xff]
        %v349 = vld [vmem:[%s274 + $0x8] sm:$0xff]
        %v350 = vsub.f32 %v346, %v348
        %v351 = vsub.f32 %v347, %v349
        %v352 = vld [vmem:[#allocation2] sm:$0x1]
        %v353 = vadd.f32 %v350, %v351
        %v354 = vrot.slane %v353, 4
        %v355 = vadd.f32 %v353, %v354
        %v356 = vrot.slane %v355, 2
        %v357 = vadd.f32 %v355, %v356
        %v358 = vrot.slane %v357, 1
        %v359 = vadd.f32 %v357, %v358
        %v360 = vadd.f32 %v352, %v359
        %361 = vst [vmem:[#allocation2] sm:$0x1] %v360
        // Predicated region
        $region53: #{tpu_custom_call.1} parent=35 // pred_check
          %p362 = pneg %p336
        $region54: #{tpu_custom_call.1} parent=35 // pred_check_branch
          %364 = sbr.rel (%p362) target = $region56
        $region55: #{tpu_custom_call.1} parent=35 // pred_region
          %v365 = vld [vmem:[#allocation2] sm:$0x1]
          %v366 = vld [vmem:[%s328] sm:$0x1]
          %v367 = vld [vmem:[%s333] sm:$0x1]
          %v368 = vmin.f32 %v365, 0.0
          %v369 = vand.u32 2147483647, %v365
          %v370 = vsub.f32 0.0, %v369
          %v371 = vmul.f32 %v370, 1.442695
          %v372 = vpow.pop %v371
          %v373 = vadd.f32 %v372, 1.0
          %v374 = vlog2.pop %v373
          %v375 = vmul.f32 %v374, 0.6931472
          %v376 = vsub.f32 %v368, %v375
          %v377 = vmax.f32 %v376, -100.0
          %v378 = vsub.f32 0.0, %v365
          %v379 = vmin.f32 %v378, 0.0
          %v380 = vand.u32 2147483647, %v378
          %v381 = vsub.f32 0.0, %v380
          %v382 = vmul.f32 %v381, 1.442695
          %v383 = vpow.pop %v382
          %v384 = vadd.f32 %v383, 1.0
          %v385 = vlog2.pop %v384
          %v386 = vmul.f32 %v385, 0.6931472
          %v387 = vsub.f32 %v379, %v386
          %v388 = vmax.f32 %v387, -100.0
          %v389 = vld [vmem:[#allocation3] sm:$0x1]
          %v390 = vmul.f32 %v366, %v377
          %v391 = vsub.f32 1.0, %v366
          %v392 = vmul.f32 %v391, %v388
          %v393 = vadd.f32 %v390, %v392
          %v394 = vsub.f32 0.0, %v393
          %v395 = vmul.f32 %v394, %v367
          %v396 = vadd.f32 %v389, %v395
          %397 = vst [vmem:[#allocation3] sm:$0x1] %v396
        $region56: #{tpu_custom_call.1} parent=35 // pred_fallthru
          _
        // Predicated region
        $region57: #{tpu_custom_call.1} parent=35 // pred_check
          _
        $region58: #{tpu_custom_call.1} parent=35 // pred_check_branch
          %399 = sbr.rel (%p337) target = $region60
        $region59: #{tpu_custom_call.1} parent=35 // pred_region
          %v400 = vld [vmem:[#allocation3] sm:$0x1]
          %vm401 = vcmask 1040384
          %v402 = vsel %vm401, %v400, 0.0
          %403 = vadd.xlane.f32.xlu0 %v402
          %v404 = vpop.xlane.xlu0 %403
          %v405 = vlaneseq
          %v406 = vshrl.u32 %v405, 7
          %v407 = vsub.s32 0, %v406
          %v408 = vrot.slane %v404, %v407
          %409 = vst [vmem:[%s320] sm:$0xff] %v408
        $region60: #{tpu_custom_call.1} parent=35 // pred_fallthru
          _
        %s410 = sand.u32 %s167, 1
        %s411 = scalar_lea.sflag [#allocation6], %s410
        %s412 = sand.u32 %s167, 1
        %s413 = smul.addr %s412, 8
        %s414 = scalar_lea.vmem [#allocation9], %s413
        // Predicated region
        $region61: #{tpu_custom_call.1} parent=35 // pred_check
          %p415 = pneg %p177
        $region62: #{tpu_custom_call.1} parent=35 // pred_check_branch
          %417 = sbr.rel (%p415) target = $region64
        $region63: #{tpu_custom_call.1} parent=35 // pred_region
          %s419 = ssub.s32 128, 128
          %420 = vsyncadd %s411, %s419
          %s421 = smul.addr %s29, 128
          %s422 = scalar_lea.hbm %s4, %s421
          %s424 = sshll.u32 %s414, 4
          %s425 = int_to_ptr.vmem [resolvable:$true] %s424
          %427 = dma.vmem_to_hbm [thread:$0]  %s425, 128, %s422, %s411
        $region64: #{tpu_custom_call.1} parent=35 // pred_fallthru
          _
      $region36: #{tpu_custom_call.1} parent=5 // pred_fallthru
        _
      %p428 = scmp.le.s32.totalorder 2, %s19
      // Predicated region
      $region65: #{tpu_custom_call.1} parent=5 // pred_check
        %p429 = pneg %p428
      $region66: #{tpu_custom_call.1} parent=5 // pred_check_branch
        %431 = sbr.rel (%p429) target = $region68
      $region67: #{tpu_custom_call.1} parent=5 // pred_region
        %s432 = ssub.s32 %s19, 2
        // Predicated region
        $region69: #{tpu_custom_call.1} parent=67 // pred_check
          %p433 = pneg %p183
        $region70: #{tpu_custom_call.1} parent=67 // pred_check_branch
          %435 = sbr.rel (%p433) target = $region72
        $region71: #{tpu_custom_call.1} parent=67 // pred_region
          %s436 = sand.u32 %s168, 1
          %s437 = scalar_lea.sflag [#allocation6], %s436
          %s438 = sand.u32 %s168, 1
          %s439 = smul.addr %s438, 8
          %s440 = scalar_lea.vmem [#allocation9], %s439
          %441 = dma.done %s437, 128
        $region72: #{tpu_custom_call.1} parent=67 // pred_fallthru
          _
      $region68: #{tpu_custom_call.1} parent=5 // pred_fallthru
        _
    $region6: #{tpu_custom_call.1} parent=1 // loop_footer
      %s23 = sadd.s32 1, %s19
    $region7: #{tpu_custom_call.1} parent=1 // loop_footer_branch
      %18 = sbr.rel target = $region3
    $region8: #{tpu_custom_call.1} parent=1 // loop_exit
      _
    %442 = vsyncpa [#allocation5], 1
    %s443 = scalar_lea.sflag [#allocation5], 1
    %444 = vsyncpa %s443, 1
    %445 = vsyncpa [#allocation8], 1
    %s446 = scalar_lea.sflag [#allocation8], 1
    %447 = vsyncpa %s446, 1
    %448 = vsyncpa [#allocation6], 1
    %s449 = scalar_lea.sflag [#allocation6], 1
    %450 = vsyncpa %s449, 1

</llo_original>
